<compile_context>
chip_gen: v7x
topology: tpu7x:2x2x1
jax: 0.10.0
libtpu: 0.0.40
codegen_flags: <defaults>
</compile_context>

<pallas_src>
import math

import jax
import jax.numpy as jnp
from jax.experimental import pallas as pl
from jax.experimental.pallas import tpu as pltpu


def _state_cost_kernel(xt_ref, recon_ref, out_ref):
    # xt_ref:    (1, R, D) with R = block_n * T            (VMEM, streamed)
    # recon_ref: (1, T, D)                                 (VMEM, resident per b)
    # out_ref:   (1, 1, R)                                 (VMEM, lane-dense)
    _, r, d = xt_ref.shape
    t_len = recon_ref.shape[1]
    reps = r // t_len

    xt = xt_ref[...].astype(jnp.float32)                  # (1, R, D)
    recon = recon_ref[...].astype(jnp.float32)            # (1, T, D)

    # Tile recon along the fused (N*T) row axis so it lines up with xt's rows.
    # The reshape only merges leading/sublane dims (lane dim D untouched), so
    # it does not require a lane relayout.
    recon_rows = jnp.broadcast_to(
        recon[:, None, :, :], (1, reps, t_len, d)).reshape(1, r, d)

    diff = jnp.abs(xt - recon_rows)                        # (1, R, D) f32
    acc = jnp.sum(diff, axis=-1) * (1.0 / d)               # (1, R)   f32
    out_ref[...] = acc[:, None, :].astype(out_ref.dtype)   # (1, 1, R)


def _choose_block_n(N, T, D, itemsize, target_bytes):
    """Rows of xt (along N) processed per grid step."""
    row_bytes = T * D * itemsize
    tn = int(max(1, target_bytes // row_bytes))
    if tn >= N:
        return int(N)
    # Keep (block_n * T) a multiple of 128 so the flattened xt/out blocks stay
    # tiling-legal and the output stores are fully lane-dense.
    m = 128 // math.gcd(T, 128)
    if tn < m:
        return int(N)  # cannot tile legally below target -> take whole N
    return int((tn // m) * m)


def vae_state_cost_forward(xt, t, recon_xt, *, block_n=None,
                           target_block_bytes=4 << 20,
                           vmem_limit_bytes=48 << 20):
    """xt: (B,N,T,D), t: (T,), recon_xt: (B,T,D) -> (B,N,T)."""
    B, N, T, D = xt.shape
    assert t.shape == (T,)
    assert recon_xt.shape == (B, T, D)

    itemsize = xt.dtype.itemsize
    if block_n is None:
        block_n = _choose_block_n(N, T, D, itemsize, target_block_bytes)
    else:
        block_n = int(min(block_n, N))
        if block_n < N and (block_n * T) % 128 != 0:
            raise ValueError(
                "block_n * T must be a multiple of 128 when block_n < N "
                f"(got block_n={block_n}, T={T})")

    num_n_tiles = pl.cdiv(N, block_n)
    R = block_n * T                      # rows of the fused (N*T) axis per step

    # Free, contiguous reshapes: no data movement.
    xt_flat = xt.reshape(B, N * T, D)

    grid_spec = pltpu.PrefetchScalarGridSpec(
        num_scalar_prefetch=0,
        grid=(B, num_n_tiles),           # n innermost: recon re-used across n
        in_specs=[
            pl.BlockSpec((1, R, D), lambda b, n: (b, n, 0)),
            pl.BlockSpec((1, T, D), lambda b, n: (b, 0, 0)),
        ],
        out_specs=pl.BlockSpec((1, 1, R), lambda b, n: (b, 0, n)),
    )

    bytes_accessed = (xt.size * itemsize
                      + recon_xt.size * recon_xt.dtype.itemsize
                      + B * N * T * itemsize)
    cost = pl.CostEstimate(flops=3 * B * N * T * D,
                           transcendentals=0,
                           bytes_accessed=bytes_accessed)

    out_flat = pl.pallas_call(
        _state_cost_kernel,
        out_shape=jax.ShapeDtypeStruct((B, 1, N * T), xt.dtype),
        grid_spec=grid_spec,
        compiler_params=pltpu.CompilerParams(
            dimension_semantics=("parallel", "parallel"),
            vmem_limit_bytes=vmem_limit_bytes,
        ),
        cost_estimate=cost,
    )(xt_flat, recon_xt)

    return out_flat.reshape(B, N, T)


def _reference(xt, recon_xt):
    return jnp.mean(jnp.abs(xt - recon_xt[:, None, :, :]), axis=-1)


if __name__ == "__main__":
    key = jax.random.PRNGKey(0)
    k1, k2, k3, k4 = jax.random.split(key, 4)

    # Case 1: small shapes consistent with forward() (single N-tile per batch).
    B, N, T, D = 2, 4, 8, 256
    xt = jax.random.normal(k1, (B, N, T, D), dtype=jnp.float32)
    recon_xt = jax.random.normal(k2, (B, T, D), dtype=jnp.float32)
    t = jnp.linspace(0.0, 1.0, T, dtype=jnp.float32)

    out = jax.block_until_ready(vae_state_cost_forward(xt, t, recon_xt))
    ref = _reference(xt, recon_xt)
    assert out.shape == (B, N, T)
    assert jnp.allclose(out, ref, atol=1e-5, rtol=1e-5)

    # Case 2: larger N with explicit N-tiling (grid=(B, 4)); exercises the
    # recon-resident inner axis and 128-wide lane-dense output blocks.
    B2, N2, T2, D2 = 2, 64, 8, 256
    xt2 = jax.random.normal(k3, (B2, N2, T2, D2), dtype=jnp.float32)
    recon2 = jax.random.normal(k4, (B2, T2, D2), dtype=jnp.float32)
    t2 = jnp.linspace(0.0, 1.0, T2, dtype=jnp.float32)

    out2 = jax.block_until_ready(
        vae_state_cost_forward(xt2, t2, recon2, block_n=16))
    ref2 = _reference(xt2, recon2)
    assert out2.shape == (B2, N2, T2)
    assert jnp.allclose(out2, ref2, atol=1e-5, rtol=1e-5)

    print("KERNEL_OK")
</pallas_src>

<mosaic_0001>
module attributes {stable_mosaic.version = 11 : i64} {
  func.func @_state_cost_kernel(%arg0: i32, %arg1: i32, %arg2: memref<1x32x256xf32, #tpu.memory_space<vmem>>, %arg3: memref<1x8x256xf32, #tpu.memory_space<vmem>>, %arg4: memref<1x1x32xf32, #tpu.memory_space<vmem>>) attributes {dimension_semantics = [#tpu.dimension_semantics<parallel>, #tpu.dimension_semantics<parallel>], iteration_bounds = array<i64: 2, 1>, scalar_prefetch = 0 : i64, scratch_operands = 0 : i64, tpu.core_type = #tpu.core_type<tc>, window_params = [{transform_indices = @transform_0, window_bounds = array<i64: 1, 32, 256>}, {transform_indices = @transform_1, window_bounds = array<i64: 1, 8, 256>}, {transform_indices = @transform_2, window_bounds = array<i64: 1, 1, 32>}]} {
    %c0 = arith.constant 0 : index
    %c0_0 = arith.constant 0 : index
    %c0_1 = arith.constant 0 : index
    %0 = vector.load %arg2[%c0, %c0_0, %c0_1] : memref<1x32x256xf32, #tpu.memory_space<vmem>>, vector<1x32x256xf32>
    %c0_2 = arith.constant 0 : index
    %c0_3 = arith.constant 0 : index
    %c0_4 = arith.constant 0 : index
    %1 = vector.load %arg3[%c0_2, %c0_3, %c0_4] : memref<1x8x256xf32, #tpu.memory_space<vmem>>, vector<1x8x256xf32>
    %2 = vector.shape_cast %1 : vector<1x8x256xf32> to vector<1x1x8x256xf32>
    %3 = vector.shape_cast %2 : vector<1x1x8x256xf32> to vector<1x1x8x256xf32>
    %4 = vector.broadcast %3 : vector<1x1x8x256xf32> to vector<1x4x8x256xf32>
    %5 = vector.shape_cast %4 : vector<1x4x8x256xf32> to vector<1x32x256xf32>
    %6 = arith.subf %0, %5 : vector<1x32x256xf32>
    %7 = math.absf %6 : vector<1x32x256xf32>
    %cst = arith.constant dense<0.000000e+00> : vector<1x32xf32>
    %8 = vector.multi_reduction <add>, %7, %cst [2] : vector<1x32x256xf32> to vector<1x32xf32>
    %cst_5 = arith.constant 3.906250e-03 : f32
    %9 = vector.broadcast %cst_5 : f32 to vector<1x32xf32>
    %10 = arith.mulf %8, %9 : vector<1x32xf32>
    %11 = vector.shape_cast %10 : vector<1x32xf32> to vector<1x1x32xf32>
    %c0_6 = arith.constant 0 : index
    %c0_7 = arith.constant 0 : index
    %c0_8 = arith.constant 0 : index
    %12 = vector.load %arg4[%c0_6, %c0_7, %c0_8] : memref<1x1x32xf32, #tpu.memory_space<vmem>>, vector<1x1x32xf32>
    tpu.vector_store %arg4[%c0_6, %c0_7, %c0_8], %11 {strides = array<i32>} : memref<1x1x32xf32, #tpu.memory_space<vmem>>, vector<1x1x32xf32>,
    return
  }
  func.func @transform_0(%arg0: i32, %arg1: i32) -> (i32, i32, i32) {
    %c0_i32 = arith.constant 0 : i32
    %c0_i32_0 = arith.constant 0 : i32
    return %arg0, %arg1, %c0_i32 : i32, i32, i32
  }
  func.func @transform_1(%arg0: i32, %arg1: i32) -> (i32, i32, i32) {
    %c0_i32 = arith.constant 0 : i32
    %c0_i32_0 = arith.constant 0 : i32
    %c0_i32_1 = arith.constant 0 : i32
    return %arg0, %c0_i32, %c0_i32_0 : i32, i32, i32
  }
  func.func @transform_2(%arg0: i32, %arg1: i32) -> (i32, i32, i32) {
    %c0_i32 = arith.constant 0 : i32
    %c0_i32_0 = arith.constant 0 : i32
    return %arg0, %c0_i32, %arg1 : i32, i32, i32
  }
}

</mosaic_0001>

<llo_original>
// kernel: tpu_custom_call.1
$region0: #{tpu_custom_call.1}
  #allocation0 [shape = 'u32[]', space=smem, size = 0x4, offset = 0x4, fixed_abs, tag = 'smem constant byte address 0x4 - core index']
  #allocation1 [shape = 'u32[144,128]{1,0:T(1,128)}', space=vmem, size = 0x12000, scoped, tag = 'internal scratch']
  %s0 = inlined_call_operand.hbm [shape: f32[2,32,256], index: 0, kind: input, shape index: {}]
  %s1 = inlined_call_operand.hbm [shape: f32[2,8,256], index: 1, kind: input, shape index: {}]
  %s2 = inlined_call_operand.hbm [shape: f32[2,1,32], index: 2, kind: output, shape index: {}]
  %s3 = sld [smem:[#allocation0]]
  $region49: #{tpu_custom_call.1} parent=0
    _
  %s5 = ssub.s32 1, %s3
  %s6 = scalar_select 0, %s5, %s3
  $region1: #{tpu_custom_call.1} parent=0
    #allocation2 [shape = 'u8[65536]{0}', space=vmem, size = 0x10000, scoped, tag = 'input window, operand 0']
    #allocation3 [shape = 's32[2]{0}', space=sflag, size = 0x8, scoped, tag = 'scoped memory for tpu_custom_call.1']
    #allocation4 [shape = 's32[2]{0}', space=sflag, size = 0x8, scoped, tag = 'scoped memory for tpu_custom_call.1']
    #allocation5 [shape = 'u8[16384]{0}', space=vmem, size = 0x4000, scoped, tag = 'input window, operand 1']
    #allocation6 [shape = 's32[2]{0}', space=sflag, size = 0x8, scoped, tag = 'scoped memory for tpu_custom_call.1']
    #allocation7 [shape = 'u8[1024]{0}', space=vmem, size = 0x400, scoped, tag = 'output window, operand 0']
    %7 = vsyncpa [#allocation3], 0
    %s8 = scalar_lea.sflag [#allocation3], 1
    %9 = vsyncpa %s8, 0
    %10 = vsyncpa [#allocation6], 0
    %s11 = scalar_lea.sflag [#allocation6], 1
    %12 = vsyncpa %s11, 0
    %13 = vsyncpa [#allocation4], 0
    %s14 = scalar_lea.sflag [#allocation4], 1
    %15 = vsyncpa %s14, 0
    loop: start=0, step=1, limit=4
    $region2: #{tpu_custom_call.1} parent=1 // loop_pre_header
      _
    $region3: #{tpu_custom_call.1} parent=1 // loop_header
      %s17 = sphi 0, %s21
      %p18 = scmp.ge.s32.totalorder %s17, 4
      %s24 = sphi 0, %s36
      %s25 = sphi 0, %s32
      %s26 = sphi 0, %s24
      %s27 = sphi 0, %s25
      %s28 = sphi 0, %s26
      %s29 = sphi 0, %s27
      %s41 = sphi 0, %s43
      %s44 = sphi 0, %s41
      %s45 = sphi 0, %s44
      %s61 = sphi 0, %s45
      %s67 = sphi 0, %s69
      %s70 = sphi 0, %s67
      %s71 = sphi 0, %s70
      %s87 = sphi 0, %s71
      %s95 = sphi 0, %s97
      %s98 = sphi 0, %s95
      %s99 = sphi 0, %s98
      %s115 = sphi 0, %s99
    $region4: #{tpu_custom_call.1} parent=1 // loop_header_branch
      %20 = sbr.rel (%p18) target = $region8
    $region5: #{tpu_custom_call.1} parent=1 // loop_body
      %s22 = ssub.s32 %s17, 1
      %s23 = ssub.s32 %s17, 2
      %s30 = sadd.s32 1, %s25
      %p31 = scmp.ge.s32.totalorder %s30, 1
      %s32 = scalar_select %p31, 0, %s30
      %s33 = sadd.s32 1, %s24
      %s34 = scalar_select %p31, %s33, %s24
      %p35 = scmp.ge.s32.totalorder %s34, 2
      %s36 = scalar_select %p35, 0, %s34
      %s37 = ssub.s32 %s24, %s36
      %s38 = ssub.s32 %s25, %s32
      %s39 = sor.u32 %s37, %s38
      %p40 = scmp.eq.s32.totalorder %s39, 0
      %s42 = sadd.s32 %s41, 1
      %s43 = scalar_select %p40, %s41, %s42
      %p46 = pneg %p40
      %p47 = scmp.eq.s32.totalorder %s17, 1
      %p48 = por %p46, %p47
      %p49 = scmp.ne.s32.totalorder %s41, %s44
      %p50 = scmp.eq.s32.totalorder %s17, 0
      %p51 = por %p49, %p50
      %p52 = scmp.ne.s32.totalorder %s41, %s44
      %p53 = scmp.eq.s32.totalorder %s22, 1
      %p54 = por %p52, %p53
      %p55 = scmp.ne.s32.totalorder %s44, %s45
      %p56 = scmp.eq.s32.totalorder %s22, 0
      %p57 = por %p55, %p56
      %p58 = scmp.ne.s32.totalorder %s44, %s45
      %p59 = scmp.eq.s32.totalorder %s23, 1
      %p60 = por %p58, %p59
      %p62 = scmp.ne.s32.totalorder %s45, %s61
      %p63 = scmp.eq.s32.totalorder %s23, 0
      %p64 = por %p62, %p63
      %s65 = ssub.s32 %s24, %s36
      %p66 = scmp.eq.s32.totalorder %s65, 0
      %s68 = sadd.s32 %s67, 1
      %s69 = scalar_select %p66, %s67, %s68
      %p72 = pneg %p66
      %p73 = scmp.eq.s32.totalorder %s17, 1
      %p74 = por %p72, %p73
      %p75 = scmp.ne.s32.totalorder %s67, %s70
      %p76 = scmp.eq.s32.totalorder %s17, 0
      %p77 = por %p75, %p76
      %p78 = scmp.ne.s32.totalorder %s67, %s70
      %p79 = scmp.eq.s32.totalorder %s22, 1
      %p80 = por %p78, %p79
      %p81 = scmp.ne.s32.totalorder %s70, %s71
      %p82 = scmp.eq.s32.totalorder %s22, 0
      %p83 = por %p81, %p82
      %p84 = scmp.ne.s32.totalorder %s70, %s71
      %p85 = scmp.eq.s32.totalorder %s23, 1
      %p86 = por %p84, %p85
      %p88 = scmp.ne.s32.totalorder %s71, %s87
      %p89 = scmp.eq.s32.totalorder %s23, 0
      %p90 = por %p88, %p89
      %s91 = ssub.s32 %s24, %s36
      %s92 = ssub.s32 %s25, %s32
      %s93 = sor.u32 %s91, %s92
      %p94 = scmp.eq.s32.totalorder %s93, 0
      %s96 = sadd.s32 %s95, 1
      %s97 = scalar_select %p94, %s95, %s96
      %p100 = pneg %p94
      %p101 = scmp.eq.s32.totalorder %s17, 1
      %p102 = por %p100, %p101
      %p103 = scmp.ne.s32.totalorder %s95, %s98
      %p104 = scmp.eq.s32.totalorder %s17, 0
      %p105 = por %p103, %p104
      %p106 = scmp.ne.s32.totalorder %s95, %s98
      %p107 = scmp.eq.s32.totalorder %s22, 1
      %p108 = por %p106, %p107
      %p109 = scmp.ne.s32.totalorder %s98, %s99
      %p110 = scmp.eq.s32.totalorder %s22, 0
      %p111 = por %p109, %p110
      %p112 = scmp.ne.s32.totalorder %s98, %s99
      %p113 = scmp.eq.s32.totalorder %s23, 1
      %p114 = por %p112, %p113
      %p116 = scmp.ne.s32.totalorder %s99, %s115
      %p117 = scmp.eq.s32.totalorder %s23, 0
      %p118 = por %p116, %p117
      %p119 = scmp.le.s32.totalorder 1, %s17
      %p120 = scmp.lt.s32.totalorder %s17, 3
      %p121 = pnand %p119, %p120
      %p122 = pneg %p121
      // Predicated region
      $region9: #{tpu_custom_call.1} parent=5 // pred_check
        _
      $region10: #{tpu_custom_call.1} parent=5 // pred_check_branch
        %124 = sbr.rel (%p121) target = $region12
      $region11: #{tpu_custom_call.1} parent=5 // pred_region
        %s125 = ssub.s32 %s17, 1
      $region12: #{tpu_custom_call.1} parent=5 // pred_fallthru
        _
      %p126 = scmp.lt.s32.totalorder %s17, 2
      // Predicated region
      $region13: #{tpu_custom_call.1} parent=5 // pred_check
        %p127 = pneg %p126
      $region14: #{tpu_custom_call.1} parent=5 // pred_check_branch
        %129 = sbr.rel (%p127) target = $region16
      $region15: #{tpu_custom_call.1} parent=5 // pred_region
        // Predicated region
        $region17: #{tpu_custom_call.1} parent=15 // pred_check
          %p130 = pneg %p51
        $region18: #{tpu_custom_call.1} parent=15 // pred_check_branch
          %132 = sbr.rel (%p130) target = $region20
        $region19: #{tpu_custom_call.1} parent=15 // pred_region
          %s133 = sand.u32 %s41, 1
          %s134 = scalar_lea.sflag [#allocation3], %s133
          %s135 = sand.u32 %s41, 1
          %s136 = smul.addr %s135, 64
          %s137 = scalar_lea.vmem [#allocation2], %s136
          %s138 = smul.u32 4, %s25
          %s140 = ssub.s32 1024, 1024
          %141 = vsyncadd %s134, %s140
          %s142 = smul.addr %s138, 2
          %s143 = smul.addr %s24, 8
          %s144 = sadd.s32 %s142, %s143
          %s145 = smul.addr %s144, 128
          %s146 = scalar_lea.hbm %s0, %s145
          %s147 = sshll.u32 %s137, 4
          %s148 = int_to_ptr.vmem [resolvable:$true] %s147
          %153 = dma.hbm_to_vmem [thread:$0]  %s146, 1024, %s148, %s134, 256, 256, 16
        $region20: #{tpu_custom_call.1} parent=15 // pred_fallthru
          _
        // Predicated region
        $region21: #{tpu_custom_call.1} parent=15 // pred_check
          %p154 = pneg %p77
        $region22: #{tpu_custom_call.1} parent=15 // pred_check_branch
          %156 = sbr.rel (%p154) target = $region24
        $region23: #{tpu_custom_call.1} parent=15 // pred_region
          %s157 = sand.u32 %s67, 1
          %s158 = scalar_lea.sflag [#allocation6], %s157
          %s159 = sand.u32 %s67, 1
          %s160 = smul.addr %s159, 16
          %s161 = scalar_lea.vmem [#allocation5], %s160
          %s163 = ssub.s32 256, 256
          %164 = vsyncadd %s158, %s163
          %s165 = smul.addr %s24, 2
          %s166 = smul.addr %s165, 128
          %s167 = scalar_lea.hbm %s1, %s166
          %s169 = sshll.u32 %s161, 4
          %s170 = int_to_ptr.vmem [resolvable:$true] %s169
          %172 = dma.hbm_to_vmem [thread:$0]  %s167, 256, %s170, %s158
        $region24: #{tpu_custom_call.1} parent=15 // pred_fallthru
          _
      $region16: #{tpu_custom_call.1} parent=5 // pred_fallthru
        _
      %p173 = scmp.le.s32.totalorder 1, %s17
      %p174 = scmp.lt.s32.totalorder %s17, 3
      %p175 = pnand %p173, %p174
      %p176 = pneg %p175
      // Predicated region
      $region25: #{tpu_custom_call.1} parent=5 // pred_check
        _
      $region26: #{tpu_custom_call.1} parent=5 // pred_check_branch
        %178 = sbr.rel (%p175) target = $region28
      $region27: #{tpu_custom_call.1} parent=5 // pred_region
        %s179 = ssub.s32 %s17, 1
        %s180 = sand.u32 %s44, 1
        %s181 = scalar_lea.sflag [#allocation3], %s180
        %s182 = sand.u32 %s44, 1
        %s183 = smul.addr %s182, 64
        %s184 = scalar_lea.vmem [#allocation2], %s183
        // Predicated region
        $region29: #{tpu_custom_call.1} parent=27 // pred_check
          %p185 = pneg %p57
        $region30: #{tpu_custom_call.1} parent=27 // pred_check_branch
          %187 = sbr.rel (%p185) target = $region32
        $region31: #{tpu_custom_call.1} parent=27 // pred_region
          %188 = dma.done %s181, 1024
        $region32: #{tpu_custom_call.1} parent=27 // pred_fallthru
          _
        %s189 = sand.u32 %s70, 1
        %s190 = scalar_lea.sflag [#allocation6], %s189
        %s191 = sand.u32 %s70, 1
        %s192 = smul.addr %s191, 16
        %s193 = scalar_lea.vmem [#allocation5], %s192
        // Predicated region
        $region33: #{tpu_custom_call.1} parent=27 // pred_check
          %p194 = pneg %p83
        $region34: #{tpu_custom_call.1} parent=27 // pred_check_branch
          %196 = sbr.rel (%p194) target = $region36
        $region35: #{tpu_custom_call.1} parent=27 // pred_region
          %197 = dma.done %s190, 256
        $region36: #{tpu_custom_call.1} parent=27 // pred_fallthru
          _
        %s198 = sand.u32 %s44, 1
        %s199 = scalar_lea.sflag [#allocation3], %s198
        %s200 = sand.u32 %s44, 1
        %s201 = smul.addr %s200, 64
        %s202 = scalar_lea.vmem [#allocation2], %s201
        %p203 = pneg %p57
        %p204 = pneg %p54
        %s205 = sand.u32 %s70, 1
        %s206 = scalar_lea.sflag [#allocation6], %s205
        %s207 = sand.u32 %s70, 1
        %s208 = smul.addr %s207, 16
        %s209 = scalar_lea.vmem [#allocation5], %s208
        %p210 = pneg %p83
        %p211 = pneg %p80
        %p212 = pneg %p111
        %p213 = pneg %p108
        %s214 = sand.u32 %s98, 1
        %s215 = scalar_lea.sflag [#allocation4], %s214
        %s216 = sand.u32 %s98, 1
        %s217 = scalar_lea.vmem [#allocation7], %s216
        %s218 = smul.u32 4, %s27
        %v219 = vld [vmem:[%s184] sm:$0xff]
        %v220 = vld [vmem:[%s184 + $0x8] sm:$0xff]
        %v221 = vld [vmem:[%s184 + $0x10] sm:$0xff]
        %v222 = vld [vmem:[%s184 + $0x18] sm:$0xff]
        %v223 = vld [vmem:[%s184 + $0x20] sm:$0xff]
        %v224 = vld [vmem:[%s184 + $0x28] sm:$0xff]
        %v225 = vld [vmem:[%s184 + $0x30] sm:$0xff]
        %v226 = vld [vmem:[%s184 + $0x38] sm:$0xff]
        %v227 = vld [vmem:[%s193] sm:$0xff]
        %v228 = vld [vmem:[%s193 + $0x8] sm:$0xff]
        %v229 = vsub.f32 %v219, %v227
        %v230 = vsub.f32 %v220, %v228
        %v231 = vsub.f32 %v221, %v227
        %v232 = vsub.f32 %v222, %v228
        %v233 = vsub.f32 %v223, %v227
        %v234 = vsub.f32 %v224, %v228
        %v235 = vsub.f32 %v225, %v227
        %v236 = vsub.f32 %v226, %v228
        %v237 = vand.u32 2147483647, %v229
        %v238 = vand.u32 2147483647, %v230
        %v239 = vand.u32 2147483647, %v231
        %v240 = vand.u32 2147483647, %v232
        %v241 = vand.u32 2147483647, %v233
        %v242 = vand.u32 2147483647, %v234
        %v243 = vand.u32 2147483647, %v235
        %v244 = vand.u32 2147483647, %v236
        %v245 = vadd.f32 %v237, %v238
        %246 = vadd.xlane.f32.xlu0 %v245
        %v247 = vpop.xlane.xlu0 %246
        %v248 = vadd.f32 %v239, %v240
        %249 = vadd.xlane.f32.xlu0 %v248
        %v250 = vpop.xlane.xlu0 %249
        %v251 = vadd.f32 %v241, %v242
        %252 = vadd.xlane.f32.xlu0 %v251
        %v253 = vpop.xlane.xlu0 %252
        %v254 = vadd.f32 %v243, %v244
        %255 = vadd.xlane.f32.xlu0 %v254
        %v256 = vpop.xlane.xlu0 %255
        %v257 = vmul.f32 %v247, 0.00390625
        %v258 = vmul.f32 %v250, 0.00390625
        %v259 = vmul.f32 %v253, 0.00390625
        %v260 = vmul.f32 %v256, 0.00390625
        %v265 = vlaneseq
        %v266 = vand.u32 %v265, 127
        %v267 = vlaneseq
        %v268 = vshrl.u32 %v267, 7
        %v269 = vsub.s32 %v266, %v268
        %v270 = vrot.slane %v257, %v269
        %v271 = vadd.s32 %v266, 4294967288
        %v272 = vlaneseq
        %v273 = vshrl.u32 %v272, 7
        %v274 = vsub.s32 %v271, %v273
        %v275 = vrot.slane %v258, %v274
        %vm276 = vcmask 130112
        %v277 = vsel %vm276, %v275, %v270
        %v278 = vadd.s32 %v266, 4294967280
        %v279 = vlaneseq
        %v280 = vshrl.u32 %v279, 7
        %v281 = vsub.s32 %v278, %v280
        %v282 = vrot.slane %v259, %v281
        %vm283 = vcmask 195712
        %v284 = vsel %vm283, %v282, %v277
        %v285 = vadd.s32 %v266, 4294967272
        %v286 = vlaneseq
        %v287 = vshrl.u32 %v286, 7
        %v288 = vsub.s32 %v285, %v287
        %v289 = vrot.slane %v260, %v288
        %vm290 = vcmask 261312
        %v291 = vsel %vm290, %v289, %v284
        %vm293 = vcmask 253952
        %294 = vst.msk [vmem:[%s217] sm:$0x1] %vm293, %v291
        %s295 = sand.u32 %s98, 1
        %s296 = scalar_lea.sflag [#allocation4], %s295
        %s297 = sand.u32 %s98, 1
        %s298 = scalar_lea.vmem [#allocation7], %s297
        // Predicated region
        $region37: #{tpu_custom_call.1} parent=27 // pred_check
          %p299 = pneg %p108
        $region38: #{tpu_custom_call.1} parent=27 // pred_check_branch
          %301 = sbr.rel (%p299) target = $region40
        $region39: #{tpu_custom_call.1} parent=27 // pred_region
          %s303 = ssub.s32 16, 16
          %304 = vsyncadd %s296, %s303
          %s305 = sadd.s32 %s27, %s26
          %s306 = smul.addr %s305, 16
          %s307 = scalar_lea.hbm %s2, %s306
          %s309 = sshll.u32 %s298, 4
          %s310 = int_to_ptr.vmem [resolvable:$true] %s309
          %312 = dma.vmem_to_hbm [thread:$0]  %s310, 16, %s307, %s296
        $region40: #{tpu_custom_call.1} parent=27 // pred_fallthru
          _
      $region28: #{tpu_custom_call.1} parent=5 // pred_fallthru
        _
      %p313 = scmp.le.s32.totalorder 2, %s17
      // Predicated region
      $region41: #{tpu_custom_call.1} parent=5 // pred_check
        %p314 = pneg %p313
      $region42: #{tpu_custom_call.1} parent=5 // pred_check_branch
        %316 = sbr.rel (%p314) target = $region44
      $region43: #{tpu_custom_call.1} parent=5 // pred_region
        %s317 = ssub.s32 %s17, 2
        // Predicated region
        $region45: #{tpu_custom_call.1} parent=43 // pred_check
          %p318 = pneg %p114
        $region46: #{tpu_custom_call.1} parent=43 // pred_check_branch
          %320 = sbr.rel (%p318) target = $region48
        $region47: #{tpu_custom_call.1} parent=43 // pred_region
          %s321 = sand.u32 %s99, 1
          %s322 = scalar_lea.sflag [#allocation4], %s321
          %s323 = sand.u32 %s99, 1
          %s324 = scalar_lea.vmem [#allocation7], %s323
          %325 = dma.done %s322, 16
        $region48: #{tpu_custom_call.1} parent=43 // pred_fallthru
          _
      $region44: #{tpu_custom_call.1} parent=5 // pred_fallthru
        _
    $region6: #{tpu_custom_call.1} parent=1 // loop_footer
      %s21 = sadd.s32 1, %s17
    $region7: #{tpu_custom_call.1} parent=1 // loop_footer_branch
      %16 = sbr.rel target = $region3
    $region8: #{tpu_custom_call.1} parent=1 // loop_exit
      _
    %326 = vsyncpa [#allocation3], 1
    %s327 = scalar_lea.sflag [#allocation3], 1
    %328 = vsyncpa %s327, 1
    %329 = vsyncpa [#allocation6], 1
    %s330 = scalar_lea.sflag [#allocation6], 1
    %331 = vsyncpa %s330, 1
    %332 = vsyncpa [#allocation4], 1
    %s333 = scalar_lea.sflag [#allocation4], 1
    %334 = vsyncpa %s333, 1

</llo_original>
